<compile_context>
chip_gen: v5e
topology: v5e:2x2
jax: 0.10.0
libtpu: 0.0.40
codegen_flags: <defaults>
</compile_context>

<pallas_src>
import functools

import jax
import jax.numpy as jnp
from jax.experimental import pallas as pl
from jax.experimental.pallas import tpu as pltpu


HIDDEN = 512


def _round_up(x, m):
    return ((x + m - 1) // m) * m


def _disc_kernel(x_ref, w1_ref, b1_ref, w2_ref, b2_ref, w3_ref, b3_ref, o_ref,
                 *, model: str):
    # Layer 1: (tb, D2) @ (D2, 512) on the MXU, bf16 inputs / f32 accumulation.
    x = x_ref[...].astype(jnp.bfloat16)
    h1 = jnp.dot(x, w1_ref[...], preferred_element_type=jnp.float32) + b1_ref[...]
    h1 = jnp.maximum(h1, 0.0)                        # ReLU
    # Dropout(0.3) -> identity in eval mode.

    # Layer 2: (tb, 512) @ (512, 512) on the MXU.
    h2 = jnp.dot(h1.astype(jnp.bfloat16), w2_ref[...],
                 preferred_element_type=jnp.float32) + b2_ref[...]
    h2 = jnp.maximum(h2, 0.0)                        # ReLU

    # Layer 3 (out_features = 1): VPU multiply + lane reduction (skip the MXU entirely).
    # w3_ref is the (1, 512) row of final-layer weights; b3 is a scalar in SMEM.
    out = jnp.sum(h2 * w3_ref[...], axis=-1, keepdims=True) + b3_ref[0]   # (tb, 1) f32

    # Final activation (selected statically at trace time).
    if model == 'i-DIME':
        out = jax.nn.sigmoid(out)
    elif model == 'd-DIME':
        out = jax.nn.softplus(jnp.minimum(out, 20.0))   # torch.clamp(x, max=20) then softplus
    # 'MINE' -> identity

    o_ref[...] = out.astype(o_ref.dtype)


def discriminator_forward(x, params, model='MINE', tb=256):
    """x: (B, 2*dimension) float32. Returns (B, 1) float32."""
    assert model in ('MINE', 'i-DIME', 'd-DIME')
    w1, b1, w2, b2, w3, b3 = params
    B, D2 = x.shape
    assert w1.shape == (D2, HIDDEN)

    # Fixed batch tile: multiple of 8, capped so per-tile VMEM stays small, never
    # larger than the (padded) batch.
    tb = max(8, min(int(tb), 1024))
    tb = _round_up(tb, 8)
    tb = min(tb, _round_up(B, 8))

    # Handle ragged batches: zero-pad to a multiple of tb, slice the tail off after.
    B_pad = _round_up(B, tb)
    if B_pad != B:
        x = jnp.pad(x, ((0, B_pad - B), (0, 0)))
    num_tiles = B_pad // tb

    # Pre-cast the big weights to bf16 (native MXU rate, half the VMEM / DMA bytes);
    # biases and the final-layer row stay f32 for the VPU epilogue.
    w1_bf = w1.astype(jnp.bfloat16)
    w2_bf = w2.astype(jnp.bfloat16)
    w3_row = w3.reshape(1, HIDDEN).astype(jnp.float32)
    b1_f = b1.reshape(1, HIDDEN).astype(jnp.float32)
    b2_f = b2.reshape(1, HIDDEN).astype(jnp.float32)
    b3_s = b3.reshape(1).astype(jnp.float32)           # scalar -> SMEM

    flops = 2 * B_pad * (D2 * HIDDEN + HIDDEN * HIDDEN + HIDDEN)
    transcendentals = 0 if model == 'MINE' else B_pad
    bytes_accessed = (x.size * x.dtype.itemsize
                      + w1_bf.size * 2 + w2_bf.size * 2
                      + (b1_f.size + b2_f.size + w3_row.size + b3_s.size) * 4
                      + B_pad * 4)

    kernel = functools.partial(_disc_kernel, model=model)

    out = pl.pallas_call(
        kernel,
        out_shape=jax.ShapeDtypeStruct((B_pad, 1), jnp.float32),
        grid_spec=pltpu.PrefetchScalarGridSpec(
            num_scalar_prefetch=0,
            grid=(num_tiles,),
            in_specs=[
                pl.BlockSpec((tb, D2), lambda i: (i, 0)),            # x tile
                pl.BlockSpec((D2, HIDDEN), lambda i: (0, 0)),        # W1 (bf16, resident)
                pl.BlockSpec((1, HIDDEN), lambda i: (0, 0)),         # b1
                pl.BlockSpec((HIDDEN, HIDDEN), lambda i: (0, 0)),    # W2 (bf16, resident)
                pl.BlockSpec((1, HIDDEN), lambda i: (0, 0)),         # b2
                pl.BlockSpec((1, HIDDEN), lambda i: (0, 0)),         # W3 row (f32)
                pl.BlockSpec(memory_space=pltpu.MemorySpace.SMEM),   # b3 scalar
            ],
            out_specs=pl.BlockSpec((tb, 1), lambda i: (i, 0)),
        ),
        compiler_params=pltpu.CompilerParams(
            dimension_semantics=("parallel",)),
        cost_estimate=pl.CostEstimate(
            flops=flops,
            transcendentals=transcendentals,
            bytes_accessed=bytes_accessed),
    )(x, w1_bf, b1_f, w2_bf, b2_f, w3_row, b3_s)

    return out[:B]


def init_params(key, dimension):
    """Deterministic parameter init, shapes match the PyTorch module."""
    d_in = 2 * dimension
    ks = jax.random.split(key, 6)

    def uinit(k, shape, fan_in):
        bound = 1.0 / jnp.sqrt(fan_in)
        return jax.random.uniform(k, shape, jnp.float32, -bound, bound)

    w1 = uinit(ks[0], (d_in, HIDDEN), d_in)
    b1 = uinit(ks[1], (1, HIDDEN), d_in)
    w2 = uinit(ks[2], (HIDDEN, HIDDEN), HIDDEN)
    b2 = uinit(ks[3], (1, HIDDEN), HIDDEN)
    w3 = uinit(ks[4], (HIDDEN, 1), HIDDEN)
    b3 = uinit(ks[5], (1, 1), HIDDEN)
    return (w1, b1, w2, b2, w3, b3)


def reference_forward(x, params, model='MINE'):
    """Pure-JAX reference mirroring the kernel math (bf16 matmul inputs, f32 accum)."""
    w1, b1, w2, b2, w3, b3 = params
    h = jnp.dot(x.astype(jnp.bfloat16), w1.astype(jnp.bfloat16),
                preferred_element_type=jnp.float32) + b1.reshape(1, -1)
    h = jnp.maximum(h, 0.0)
    h = jnp.dot(h.astype(jnp.bfloat16), w2.astype(jnp.bfloat16),
                preferred_element_type=jnp.float32) + b2.reshape(1, -1)
    h = jnp.maximum(h, 0.0)
    out = h @ w3.astype(jnp.float32) + b3.reshape(1, 1)
    if model == 'i-DIME':
        out = jax.nn.sigmoid(out)
    elif model == 'd-DIME':
        out = jax.nn.softplus(jnp.minimum(out, 20.0))
    return out


if __name__ == "__main__":
    key = jax.random.PRNGKey(0)
    dimension = 16           # -> input features = 2 * dimension = 32

    k_param, k_x1, k_x2 = jax.random.split(key, 3)
    params = init_params(k_param, dimension)

    # Case 1: tiny batch, single tile; exercise all three final activations.
    x1 = jax.random.normal(k_x1, (8, 2 * dimension), jnp.float32)
    for model in ('MINE', 'i-DIME', 'd-DIME'):
        o1 = jax.block_until_ready(discriminator_forward(x1, params, model=model))
        r1 = reference_forward(x1, params, model=model)
        assert o1.shape == (8, 1)
        assert jnp.allclose(o1, r1, atol=1e-3, rtol=1e-3), f"mismatch for {model}"

    # Case 2: ragged batch (24 rows, tb=16 -> padded to 32, grid of 2 tiles).
    x2 = jax.random.normal(k_x2, (24, 2 * dimension), jnp.float32)
    o2 = jax.block_until_ready(discriminator_forward(x2, params, model='MINE', tb=16))
    r2 = reference_forward(x2, params, model='MINE')
    assert o2.shape == (24, 1)
    assert jnp.allclose(o2, r2, atol=1e-3, rtol=1e-3)

    print("KERNEL_OK")
</pallas_src>

<mosaic_0001>
module attributes {stable_mosaic.version = 11 : i64} {
  func.func @_disc_kernel(%arg0: i32, %arg1: memref<8x32xf32, #tpu.memory_space<vmem>>, %arg2: memref<32x512xbf16, #tpu.memory_space<vmem>>, %arg3: memref<1x512xf32, #tpu.memory_space<vmem>>, %arg4: memref<512x512xbf16, #tpu.memory_space<vmem>>, %arg5: memref<1x512xf32, #tpu.memory_space<vmem>>, %arg6: memref<1x512xf32, #tpu.memory_space<vmem>>, %arg7: memref<1xf32, #tpu.memory_space<smem>>, %arg8: memref<8x1xf32, #tpu.memory_space<vmem>>) attributes {dimension_semantics = [#tpu.dimension_semantics<parallel>], iteration_bounds = array<i64: 1>, scalar_prefetch = 0 : i64, scratch_operands = 0 : i64, tpu.core_type = #tpu.core_type<tc>, window_params = [{transform_indices = @transform_0, window_bounds = array<i64: 8, 32>}, {pipeline_mode = #tpu.pipeline_mode<synchronous>, transform_indices = @transform_1, window_bounds = array<i64: 32, 512>}, {pipeline_mode = #tpu.pipeline_mode<synchronous>, transform_indices = @transform_2, window_bounds = array<i64: 1, 512>}, {pipeline_mode = #tpu.pipeline_mode<synchronous>, transform_indices = @transform_3, window_bounds = array<i64: 512, 512>}, {pipeline_mode = #tpu.pipeline_mode<synchronous>, transform_indices = @transform_4, window_bounds = array<i64: 1, 512>}, {pipeline_mode = #tpu.pipeline_mode<synchronous>, transform_indices = @transform_5, window_bounds = array<i64: 1, 512>}, {transform_indices = @transform_6, window_bounds = array<i64: 1>}, {transform_indices = @transform_7, window_bounds = array<i64: 8, 1>}]} {
    %c0 = arith.constant 0 : index
    %c0_0 = arith.constant 0 : index
    %0 = vector.load %arg1[%c0, %c0_0] : memref<8x32xf32, #tpu.memory_space<vmem>>, vector<8x32xf32>
    %1 = arith.truncf %0 : vector<8x32xf32> to vector<8x32xbf16>
    %c0_1 = arith.constant 0 : index
    %c0_2 = arith.constant 0 : index
    %2 = vector.load %arg2[%c0_1, %c0_2] : memref<32x512xbf16, #tpu.memory_space<vmem>>, vector<32x512xbf16>
    %cst = arith.constant dense<0.000000e+00> : vector<8x512xf32>
    %3 = tpu.matmul %1, %2, %cst {dimension_numbers = #tpu.dot_dimension_numbers<[1], [0], [0], [1], [0, 0, 1, 1], [], []>} : vector<8x32xbf16>, vector<32x512xbf16>, vector<8x512xf32> -> vector<8x512xf32>
    %c0_3 = arith.constant 0 : index
    %c0_4 = arith.constant 0 : index
    %4 = vector.load %arg3[%c0_3, %c0_4] : memref<1x512xf32, #tpu.memory_space<vmem>>, vector<1x512xf32>
    %5 = vector.broadcast %4 : vector<1x512xf32> to vector<8x512xf32>
    %6 = arith.addf %3, %5 : vector<8x512xf32>
    %cst_5 = arith.constant 0.000000e+00 : f32
    %7 = vector.broadcast %cst_5 : f32 to vector<8x512xf32>
    %8 = arith.maximumf %6, %7 : vector<8x512xf32>
    %9 = arith.truncf %8 : vector<8x512xf32> to vector<8x512xbf16>
    %c0_6 = arith.constant 0 : index
    %c0_7 = arith.constant 0 : index
    %10 = vector.load %arg4[%c0_6, %c0_7] : memref<512x512xbf16, #tpu.memory_space<vmem>>, vector<512x512xbf16>
    %cst_8 = arith.constant dense<0.000000e+00> : vector<8x512xf32>
    %11 = tpu.matmul %9, %10, %cst_8 {dimension_numbers = #tpu.dot_dimension_numbers<[1], [0], [0], [1], [0, 0, 1, 1], [], []>} : vector<8x512xbf16>, vector<512x512xbf16>, vector<8x512xf32> -> vector<8x512xf32>
    %c0_9 = arith.constant 0 : index
    %c0_10 = arith.constant 0 : index
    %12 = vector.load %arg5[%c0_9, %c0_10] : memref<1x512xf32, #tpu.memory_space<vmem>>, vector<1x512xf32>
    %13 = vector.broadcast %12 : vector<1x512xf32> to vector<8x512xf32>
    %14 = arith.addf %11, %13 : vector<8x512xf32>
    %cst_11 = arith.constant 0.000000e+00 : f32
    %15 = vector.broadcast %cst_11 : f32 to vector<8x512xf32>
    %16 = arith.maximumf %14, %15 : vector<8x512xf32>
    %c0_12 = arith.constant 0 : index
    %c0_13 = arith.constant 0 : index
    %17 = vector.load %arg6[%c0_12, %c0_13] : memref<1x512xf32, #tpu.memory_space<vmem>>, vector<1x512xf32>
    %18 = vector.broadcast %17 : vector<1x512xf32> to vector<8x512xf32>
    %19 = arith.mulf %16, %18 : vector<8x512xf32>
    %cst_14 = arith.constant dense<0.000000e+00> : vector<8xf32>
    %20 = vector.multi_reduction <add>, %19, %cst_14 [1] : vector<8x512xf32> to vector<8xf32>
    %21 = vector.shape_cast %20 : vector<8xf32> to vector<8x1xf32>
    %c0_15 = arith.constant 0 : index
    %22 = memref.load %arg7[%c0_15] : memref<1xf32, #tpu.memory_space<smem>>
    %23 = vector.broadcast %22 : f32 to vector<8x1xf32>
    %24 = arith.addf %21, %23 : vector<8x1xf32>
    %c0_16 = arith.constant 0 : index
    %c0_17 = arith.constant 0 : index
    %25 = vector.load %arg8[%c0_16, %c0_17] : memref<8x1xf32, #tpu.memory_space<vmem>>, vector<8x1xf32>
    tpu.vector_store %arg8[%c0_16, %c0_17], %24 {strides = array<i32>} : memref<8x1xf32, #tpu.memory_space<vmem>>, vector<8x1xf32>,
    return
  }
  func.func @transform_0(%arg0: i32) -> (i32, i32) {
    %c0_i32 = arith.constant 0 : i32
    %c0_i32_0 = arith.constant 0 : i32
    return %arg0, %c0_i32 : i32, i32
  }
  func.func @transform_1(%arg0: i32) -> (i32, i32) {
    %c0_i32 = arith.constant 0 : i32
    %c0_i32_0 = arith.constant 0 : i32
    %c0_i32_1 = arith.constant 0 : i32
    return %c0_i32, %c0_i32_0 : i32, i32
  }
  func.func @transform_2(%arg0: i32) -> (i32, i32) {
    %c0_i32 = arith.constant 0 : i32
    %c0_i32_0 = arith.constant 0 : i32
    %c0_i32_1 = arith.constant 0 : i32
    return %c0_i32, %c0_i32_0 : i32, i32
  }
  func.func @transform_3(%arg0: i32) -> (i32, i32) {
    %c0_i32 = arith.constant 0 : i32
    %c0_i32_0 = arith.constant 0 : i32
    %c0_i32_1 = arith.constant 0 : i32
    return %c0_i32, %c0_i32_0 : i32, i32
  }
  func.func @transform_4(%arg0: i32) -> (i32, i32) {
    %c0_i32 = arith.constant 0 : i32
    %c0_i32_0 = arith.constant 0 : i32
    %c0_i32_1 = arith.constant 0 : i32
    return %c0_i32, %c0_i32_0 : i32, i32
  }
  func.func @transform_5(%arg0: i32) -> (i32, i32) {
    %c0_i32 = arith.constant 0 : i32
    %c0_i32_0 = arith.constant 0 : i32
    %c0_i32_1 = arith.constant 0 : i32
    return %c0_i32, %c0_i32_0 : i32, i32
  }
  func.func @transform_6(%arg0: i32) -> i32 {
    %c0_i32 = arith.constant 0 : i32
    %c0_i32_0 = arith.constant 0 : i32
    return %c0_i32 : i32
  }
  func.func @transform_7(%arg0: i32) -> (i32, i32) {
    %c0_i32 = arith.constant 0 : i32
    %c0_i32_0 = arith.constant 0 : i32
    return %arg0, %c0_i32 : i32, i32
  }
}

</mosaic_0001>

<llo_original>
// kernel: tpu_custom_call.1
$region0: #{tpu_custom_call.1}
  #allocation0 [shape = 'u32[]', space=smem, size = 0x4, offset = 0x4, fixed_abs, tag = 'smem constant byte address 0x4 - core index']
  #allocation1 [shape = 'u32[72,128]{1,0:T(1,128)}', space=vmem, size = 0x9000, scoped, tag = 'internal scratch']
  #allocation2 [shape = 'f32[1]{0:T(128)S(6)}', space=smem, size = 0x200, scoped, tag = 'scoped memory for tpu_custom_call.1']
  %s0 = inlined_call_operand.hbm [shape: f32[8,32], index: 0, kind: input, shape index: {}]
  %s1 = inlined_call_operand.hbm [shape: bf16[32,512], index: 1, kind: input, shape index: {}]
  %s2 = inlined_call_operand.hbm [shape: f32[1,512], index: 2, kind: input, shape index: {}]
  %s3 = inlined_call_operand.hbm [shape: bf16[512,512], index: 3, kind: input, shape index: {}]
  %s4 = inlined_call_operand.vmem [shape: f32[1,512], index: 4, kind: input, shape index: {}]
  %s5 = inlined_call_operand.hbm [shape: f32[1,512], index: 5, kind: input, shape index: {}]
  %s6 = inlined_call_operand.<no memory space> [shape: f32[1], index: 6, kind: input, shape index: {}]
  %s7 = inlined_call_operand.vmem [shape: f32[8,1], index: 7, kind: output, shape index: {}]
  %s8 = sld [smem:[#allocation0]]
  $region58: #{tpu_custom_call.1} parent=0
    _
  %s10 = ssub.s32 1, %s8
  %s11 = scalar_select 0, %s10, %s8
  %12 = sst [smem:[#allocation2]] %s6
  $region1: #{tpu_custom_call.1} parent=0
    #allocation3 [shape = 'u8[4096]{0}', space=vmem, size = 0x1000, scoped, tag = 'input window, operand 0, single buffered']
    #allocation4 [shape = 's32[1]{0}', space=sflag, size = 0x4, scoped, tag = 'scoped memory for tpu_custom_call.1']
    #allocation5 [shape = 'u8[32768]{0}', space=vmem, size = 0x8000, scoped, tag = 'input window, operand 1, single buffered']
    #allocation6 [shape = 's32[1]{0}', space=sflag, size = 0x4, scoped, tag = 'scoped memory for tpu_custom_call.1']
    #allocation7 [shape = 'u8[2048]{0}', space=vmem, size = 0x800, scoped, tag = 'input window, operand 2, single buffered']
    #allocation8 [shape = 'u8[524288]{0}', space=vmem, size = 0x80000, scoped, tag = 'input window, operand 3, single buffered']
    #allocation9 [shape = 's32[1]{0}', space=sflag, size = 0x4, scoped, tag = 'scoped memory for tpu_custom_call.1']
    #allocation10 [shape = 'u8[2048]{0}', space=vmem, size = 0x800, scoped, tag = 'input window, operand 5, single buffered']
    %13 = vsyncpa [#allocation4], 0
    %14 = vsyncpa [#allocation6], 0
    %15 = vsyncpa [#allocation9], 0
    // Predicated region
    $region2: #{tpu_custom_call.1} parent=1 // pred_check
      _
    $region3: #{tpu_custom_call.1} parent=1 // pred_check_branch
      %17 = sbr.rel (0) target = $region5
    $region4: #{tpu_custom_call.1} parent=1 // pred_region
      %19 = vsyncadd [#allocation4], 0
      %s21 = sshll.u32 %s0, 4
      %s22 = int_to_ptr.hbm [resolvable:$true] %s21
      %s23 = sshll.u32 [#allocation3], 4
      %s24 = int_to_ptr.vmem [resolvable:$true] %s23
      %26 = dma.hbm_to_vmem [thread:$0]  %s22, 128, %s24, [#allocation4]
    $region5: #{tpu_custom_call.1} parent=1 // pred_fallthru
      _
    // Predicated region
    $region6: #{tpu_custom_call.1} parent=1 // pred_check
      _
    $region7: #{tpu_custom_call.1} parent=1 // pred_check_branch
      %28 = sbr.rel (0) target = $region9
    $region8: #{tpu_custom_call.1} parent=1 // pred_region
      %30 = vsyncadd [#allocation6], 0
      %s31 = sshll.u32 %s1, 4
      %s32 = int_to_ptr.hbm [resolvable:$true] %s31
      %s33 = sshll.u32 [#allocation5], 4
      %s34 = int_to_ptr.vmem [resolvable:$true] %s33
      %39 = dma.hbm_to_vmem [thread:$0]  %s32, 1024, %s34, [#allocation6], 256, 256, 16
    $region9: #{tpu_custom_call.1} parent=1 // pred_fallthru
      _
    // Predicated region
    $region10: #{tpu_custom_call.1} parent=1 // pred_check
      _
    $region11: #{tpu_custom_call.1} parent=1 // pred_check_branch
      %41 = sbr.rel (0) target = $region13
    $region12: #{tpu_custom_call.1} parent=1 // pred_region
      %43 = vsyncadd [#allocation6], 0
      %s45 = sshll.u32 %s2, 4
      %s46 = int_to_ptr.hbm [resolvable:$true] %s45
      %s47 = sshll.u32 [#allocation7], 4
      %s48 = int_to_ptr.vmem [resolvable:$true] %s47
      %50 = dma.hbm_to_vmem [thread:$0]  %s46, 64, %s48, [#allocation6]
    $region13: #{tpu_custom_call.1} parent=1 // pred_fallthru
      _
    // Predicated region
    $region14: #{tpu_custom_call.1} parent=1 // pred_check
      _
    $region15: #{tpu_custom_call.1} parent=1 // pred_check_branch
      %52 = sbr.rel (0) target = $region17
    $region16: #{tpu_custom_call.1} parent=1 // pred_region
      %54 = vsyncadd [#allocation9], 0
      %s55 = sshll.u32 %s3, 4
      %s56 = int_to_ptr.hbm [resolvable:$true] %s55
      %s57 = sshll.u32 [#allocation8], 4
      %s58 = int_to_ptr.vmem [resolvable:$true] %s57
      %63 = dma.hbm_to_vmem [thread:$0]  %s56, 16384, %s58, [#allocation9], 256, 256, 16
    $region17: #{tpu_custom_call.1} parent=1 // pred_fallthru
      _
    // Predicated region
    $region18: #{tpu_custom_call.1} parent=1 // pred_check
      _
    $region19: #{tpu_custom_call.1} parent=1 // pred_check_branch
      %65 = sbr.rel (0) target = $region21
    $region20: #{tpu_custom_call.1} parent=1 // pred_region
      _
    $region21: #{tpu_custom_call.1} parent=1 // pred_fallthru
      _
    // Predicated region
    $region22: #{tpu_custom_call.1} parent=1 // pred_check
      _
    $region23: #{tpu_custom_call.1} parent=1 // pred_check_branch
      %67 = sbr.rel (0) target = $region25
    $region24: #{tpu_custom_call.1} parent=1 // pred_region
      %69 = vsyncadd [#allocation9], 0
      %s71 = sshll.u32 %s5, 4
      %s72 = int_to_ptr.hbm [resolvable:$true] %s71
      %s73 = sshll.u32 [#allocation10], 4
      %s74 = int_to_ptr.vmem [resolvable:$true] %s73
      %76 = dma.hbm_to_vmem [thread:$0]  %s72, 64, %s74, [#allocation9]
    $region25: #{tpu_custom_call.1} parent=1 // pred_fallthru
      _
    // Predicated region
    $region26: #{tpu_custom_call.1} parent=1 // pred_check
      _
    $region27: #{tpu_custom_call.1} parent=1 // pred_check_branch
      %78 = sbr.rel (0) target = $region29
    $region28: #{tpu_custom_call.1} parent=1 // pred_region
      _
    $region29: #{tpu_custom_call.1} parent=1 // pred_fallthru
      _
    // Predicated region
    $region30: #{tpu_custom_call.1} parent=1 // pred_check
      _
    $region31: #{tpu_custom_call.1} parent=1 // pred_check_branch
      %80 = sbr.rel (0) target = $region33
    $region32: #{tpu_custom_call.1} parent=1 // pred_region
      %82 = dma.done [#allocation4], 128
    $region33: #{tpu_custom_call.1} parent=1 // pred_fallthru
      _
    // Predicated region
    $region34: #{tpu_custom_call.1} parent=1 // pred_check
      _
    $region35: #{tpu_custom_call.1} parent=1 // pred_check_branch
      %84 = sbr.rel (0) target = $region37
    $region36: #{tpu_custom_call.1} parent=1 // pred_region
      %86 = dma.done [#allocation6], 1024
    $region37: #{tpu_custom_call.1} parent=1 // pred_fallthru
      _
    // Predicated region
    $region38: #{tpu_custom_call.1} parent=1 // pred_check
      _
    $region39: #{tpu_custom_call.1} parent=1 // pred_check_branch
      %88 = sbr.rel (0) target = $region41
    $region40: #{tpu_custom_call.1} parent=1 // pred_region
      %90 = dma.done [#allocation6], 64
    $region41: #{tpu_custom_call.1} parent=1 // pred_fallthru
      _
    // Predicated region
    $region42: #{tpu_custom_call.1} parent=1 // pred_check
      _
    $region43: #{tpu_custom_call.1} parent=1 // pred_check_branch
      %92 = sbr.rel (0) target = $region45
    $region44: #{tpu_custom_call.1} parent=1 // pred_region
      %94 = dma.done [#allocation9], 16384
    $region45: #{tpu_custom_call.1} parent=1 // pred_fallthru
      _
    // Predicated region
    $region46: #{tpu_custom_call.1} parent=1 // pred_check
      _
    $region47: #{tpu_custom_call.1} parent=1 // pred_check_branch
      %96 = sbr.rel (0) target = $region49
    $region48: #{tpu_custom_call.1} parent=1 // pred_region
      %98 = dma.done [#allocation9], 64
    $region49: #{tpu_custom_call.1} parent=1 // pred_fallthru
      _
    %v100 = vld [vmem:[#allocation3] sm:$0xff]
    %v101 = vpack.c.bf16 %v100, %v100
    %v102 = vld [vmem:[#allocation5] sm:$0xff]
    %v103 = vld [vmem:[#allocation5 + $0x8] sm:$0xff]
    %v104 = vld [vmem:[#allocation5 + $0x10] sm:$0xff]
    %v105 = vld [vmem:[#allocation5 + $0x18] sm:$0xff]
    %v106 = vld [vmem:[#allocation5 + $0x20] sm:$0xff]
    %v107 = vld [vmem:[#allocation5 + $0x28] sm:$0xff]
    %v108 = vld [vmem:[#allocation5 + $0x30] sm:$0xff]
    %v109 = vld [vmem:[#allocation5 + $0x38] sm:$0xff]
    %v110 = vld [vmem:[#allocation7] sm:$0xf]
    %v112 = vperm.slane %v110, 0
    %v113 = vperm.slane %v110, 1
    %v114 = vperm.slane %v110, 2
    %v115 = vperm.slane %v110, 3
    %v128 = vunpack.c.l.b16 %v102
    %v129 = vunpack.c.h.b16 %v102
    %v130 = vunpack.c.l.b16 %v103
    %v131 = vunpack.c.h.b16 %v103
    %v132 = vunpack.c.l.b16 %v104
    %v133 = vunpack.c.h.b16 %v104
    %v134 = vunpack.c.l.b16 %v105
    %v135 = vunpack.c.h.b16 %v105
    %v136 = vunpack.c.l.b16 %v106
    %v137 = vunpack.c.h.b16 %v106
    %v138 = vunpack.c.l.b16 %v107
    %v139 = vunpack.c.h.b16 %v107
    %v140 = vunpack.c.l.b16 %v108
    %v141 = vunpack.c.h.b16 %v108
    %v142 = vunpack.c.l.b16 %v109
    %v143 = vunpack.c.h.b16 %v109
    %v144 = vpack.c.b16 %v132, %v128
    %v145 = vpack.c.b16 %v133, %v129
    %v146 = vpack.c.b16 %v134, %v130
    %v147 = vpack.c.b16 %v135, %v131
    %v148 = vpack.c.b16 %v140, %v136
    %v149 = vpack.c.b16 %v141, %v137
    %v150 = vpack.c.b16 %v142, %v138
    %v151 = vpack.c.b16 %v143, %v139
    %vm160 = vcmask 261120
    %v162 = vsel %vm160, %v101, 0
    %164 = vmatpush.bf16.msra.mxu0 0
    %165 = vmatpush.bf16.msra.mxu0 0
    %166 = vmatpush.bf16.msra.mxu0 0
    %167 = vmatpush.bf16.msra.mxu0 0
    %168 = vmatpush.bf16.msra.mxu0 0
    %169 = vmatpush.bf16.msra.mxu0 0
    %170 = vmatpush.bf16.msra.mxu0 %v148
    %171 = vmatpush.bf16.msra.mxu0 %v144
    %172 = vmatmul.bf16.gmra.mxu0 %v162
    %v173 = vpop.f32.mrf.mxu0
    %v174 = vadd.f32 %v112, %v173
    %v175 = vpop.f32.mrf.mxu0
    %176 = vdwg.mxu0
    %177 = vmatpush.bf16.msra.mxu0 0
    %178 = vmatpush.bf16.msra.mxu0 0
    %179 = vmatpush.bf16.msra.mxu0 0
    %180 = vmatpush.bf16.msra.mxu0 0
    %181 = vmatpush.bf16.msra.mxu0 0
    %182 = vmatpush.bf16.msra.mxu0 0
    %183 = vmatpush.bf16.msra.mxu0 %v149
    %184 = vmatpush.bf16.msra.mxu0 %v145
    %185 = vmatmul.bf16.gmra.mxu0 %v162
    %v186 = vpop.f32.mrf.mxu0
    %v187 = vadd.f32 %v113, %v186
    %v188 = vpop.f32.mrf.mxu0
    %189 = vdwg.mxu0
    %190 = vmatpush.bf16.msra.mxu0 0
    %191 = vmatpush.bf16.msra.mxu0 0
    %192 = vmatpush.bf16.msra.mxu0 0
    %193 = vmatpush.bf16.msra.mxu0 0
    %194 = vmatpush.bf16.msra.mxu0 0
    %195 = vmatpush.bf16.msra.mxu0 0
    %196 = vmatpush.bf16.msra.mxu0 %v150
    %197 = vmatpush.bf16.msra.mxu0 %v146
    %198 = vmatmul.bf16.gmra.mxu0 %v162
    %v199 = vpop.f32.mrf.mxu0
    %v200 = vadd.f32 %v114, %v199
    %v201 = vpop.f32.mrf.mxu0
    %202 = vdwg.mxu0
    %203 = vmatpush.bf16.msra.mxu0 0
    %204 = vmatpush.bf16.msra.mxu0 0
    %205 = vmatpush.bf16.msra.mxu0 0
    %206 = vmatpush.bf16.msra.mxu0 0
    %207 = vmatpush.bf16.msra.mxu0 0
    %208 = vmatpush.bf16.msra.mxu0 0
    %209 = vmatpush.bf16.msra.mxu0 %v151
    %210 = vmatpush.bf16.msra.mxu0 %v147
    %211 = vmatmul.bf16.gmra.mxu0 %v162
    %v212 = vpop.f32.mrf.mxu0
    %v213 = vadd.f32 %v115, %v212
    %v214 = vpop.f32.mrf.mxu0
    %215 = vdwg.mxu0
    %v216 = vmax.f32 %v174, 0.0
    %v217 = vmax.f32 %v187, 0.0
    %v218 = vmax.f32 %v200, 0.0
    %v219 = vmax.f32 %v213, 0.0
    %v220 = vpack.c.bf16 %v216, %v216
    %v221 = vpack.c.bf16 %v217, %v217
    %v222 = vpack.c.bf16 %v218, %v218
    %v223 = vpack.c.bf16 %v219, %v219
    %v224 = vld [vmem:[#allocation8] sm:$0xff]
    %v225 = vld [vmem:[#allocation8 + $0x8] sm:$0xff]
    %v226 = vld [vmem:[#allocation8 + $0x10] sm:$0xff]
    %v227 = vld [vmem:[#allocation8 + $0x18] sm:$0xff]
    %v228 = vld [vmem:[#allocation8 + $0x20] sm:$0xff]
    %v229 = vld [vmem:[#allocation8 + $0x28] sm:$0xff]
    %v230 = vld [vmem:[#allocation8 + $0x30] sm:$0xff]
    %v231 = vld [vmem:[#allocation8 + $0x38] sm:$0xff]
    %v232 = vld [vmem:[#allocation8 + $0x40] sm:$0xff]
    %v233 = vld [vmem:[#allocation8 + $0x48] sm:$0xff]
    %v234 = vld [vmem:[#allocation8 + $0x50] sm:$0xff]
    %v235 = vld [vmem:[#allocation8 + $0x58] sm:$0xff]
    %v236 = vld [vmem:[#allocation8 + $0x60] sm:$0xff]
    %v237 = vld [vmem:[#allocation8 + $0x68] sm:$0xff]
    %v238 = vld [vmem:[#allocation8 + $0x70] sm:$0xff]
    %v239 = vld [vmem:[#allocation8 + $0x78] sm:$0xff]
    %v240 = vld [vmem:[#allocation8 + $0x80] sm:$0xff]
    %v241 = vld [vmem:[#allocation8 + $0x88] sm:$0xff]
    %v242 = vld [vmem:[#allocation8 + $0x90] sm:$0xff]
    %v243 = vld [vmem:[#allocation8 + $0x98] sm:$0xff]
    %v244 = vld [vmem:[#allocation8 + $0xa0] sm:$0xff]
    %v245 = vld [vmem:[#allocation8 + $0xa8] sm:$0xff]
    %v246 = vld [vmem:[#allocation8 + $0xb0] sm:$0xff]
    %v247 = vld [vmem:[#allocation8 + $0xb8] sm:$0xff]
    %v248 = vld [vmem:[#allocation8 + $0xc0] sm:$0xff]
    %v249 = vld [vmem:[#allocation8 + $0xc8] sm:$0xff]
    %v250 = vld [vmem:[#allocation8 + $0xd0] sm:$0xff]
    %v251 = vld [vmem:[#allocation8 + $0xd8] sm:$0xff]
    %v252 = vld [vmem:[#allocation8 + $0xe0] sm:$0xff]
    %v253 = vld [vmem:[#allocation8 + $0xe8] sm:$0xff]
    %v254 = vld [vmem:[#allocation8 + $0xf0] sm:$0xff]
    %v255 = vld [vmem:[#allocation8 + $0xf8] sm:$0xff]
    %v256 = vld [vmem:[#allocation8 + $0x100] sm:$0xff]
    %v257 = vld [vmem:[#allocation8 + $0x108] sm:$0xff]
    %v258 = vld [vmem:[#allocation8 + $0x110] sm:$0xff]
    %v259 = vld [vmem:[#allocation8 + $0x118] sm:$0xff]
    %v260 = vld [vmem:[#allocation8 + $0x120] sm:$0xff]
    %v261 = vld [vmem:[#allocation8 + $0x128] sm:$0xff]
    %v262 = vld [vmem:[#allocation8 + $0x130] sm:$0xff]
    %v263 = vld [vmem:[#allocation8 + $0x138] sm:$0xff]
    %v264 = vld [vmem:[#allocation8 + $0x140] sm:$0xff]
    %v265 = vld [vmem:[#allocation8 + $0x148] sm:$0xff]
    %v266 = vld [vmem:[#allocation8 + $0x150] sm:$0xff]
    %v267 = vld [vmem:[#allocation8 + $0x158] sm:$0xff]
    %v268 = vld [vmem:[#allocation8 + $0x160] sm:$0xff]
    %v269 = vld [vmem:[#allocation8 + $0x168] sm:$0xff]
    %v270 = vld [vmem:[#allocation8 + $0x170] sm:$0xff]
    %v271 = vld [vmem:[#allocation8 + $0x178] sm:$0xff]
    %v272 = vld [vmem:[#allocation8 + $0x180] sm:$0xff]
    %v273 = vld [vmem:[#allocation8 + $0x188] sm:$0xff]
    %v274 = vld [vmem:[#allocation8 + $0x190] sm:$0xff]
    %v275 = vld [vmem:[#allocation8 + $0x198] sm:$0xff]
    %v276 = vld [vmem:[#allocation8 + $0x1a0] sm:$0xff]
    %v277 = vld [vmem:[#allocation8 + $0x1a8] sm:$0xff]
    %v278 = vld [vmem:[#allocation8 + $0x1b0] sm:$0xff]
    %v279 = vld [vmem:[#allocation8 + $0x1b8] sm:$0xff]
    %v280 = vld [vmem:[#allocation8 + $0x1c0] sm:$0xff]
    %v281 = vld [vmem:[#allocation8 + $0x1c8] sm:$0xff]
    %v282 = vld [vmem:[#allocation8 + $0x1d0] sm:$0xff]
    %v283 = vld [vmem:[#allocation8 + $0x1d8] sm:$0xff]
    %v284 = vld [vmem:[#allocation8 + $0x1e0] sm:$0xff]
    %v285 = vld [vmem:[#allocation8 + $0x1e8] sm:$0xff]
    %v286 = vld [vmem:[#allocation8 + $0x1f0] sm:$0xff]
    %v287 = vld [vmem:[#allocation8 + $0x1f8] sm:$0xff]
    %v288 = vld [vmem:[#allocation8 + $0x200] sm:$0xff]
    %v289 = vld [vmem:[#allocation8 + $0x208] sm:$0xff]
    %v290 = vld [vmem:[#allocation8 + $0x210] sm:$0xff]
    %v291 = vld [vmem:[#allocation8 + $0x218] sm:$0xff]
    %v292 = vld [vmem:[#allocation8 + $0x220] sm:$0xff]
    %v293 = vld [vmem:[#allocation8 + $0x228] sm:$0xff]
    %v294 = vld [vmem:[#allocation8 + $0x230] sm:$0xff]
    %v295 = vld [vmem:[#allocation8 + $0x238] sm:$0xff]
    %v296 = vld [vmem:[#allocation8 + $0x240] sm:$0xff]
    %v297 = vld [vmem:[#allocation8 + $0x248] sm:$0xff]
    %v298 = vld [vmem:[#allocation8 + $0x250] sm:$0xff]
    %v299 = vld [vmem:[#allocation8 + $0x258] sm:$0xff]
    %v300 = vld [vmem:[#allocation8 + $0x260] sm:$0xff]
    %v301 = vld [vmem:[#allocation8 + $0x268] sm:$0xff]
    %v302 = vld [vmem:[#allocation8 + $0x270] sm:$0xff]
    %v303 = vld [vmem:[#allocation8 + $0x278] sm:$0xff]
    %v304 = vld [vmem:[#allocation8 + $0x280] sm:$0xff]
    %v305 = vld [vmem:[#allocation8 + $0x288] sm:$0xff]
    %v306 = vld [vmem:[#allocation8 + $0x290] sm:$0xff]
    %v307 = vld [vmem:[#allocation8 + $0x298] sm:$0xff]
    %v308 = vld [vmem:[#allocation8 + $0x2a0] sm:$0xff]
    %v309 = vld [vmem:[#allocation8 + $0x2a8] sm:$0xff]
    %v310 = vld [vmem:[#allocation8 + $0x2b0] sm:$0xff]
    %v311 = vld [vmem:[#allocation8 + $0x2b8] sm:$0xff]
    %v312 = vld [vmem:[#allocation8 + $0x2c0] sm:$0xff]
    %v313 = vld [vmem:[#allocation8 + $0x2c8] sm:$0xff]
    %v314 = vld [vmem:[#allocation8 + $0x2d0] sm:$0xff]
    %v315 = vld [vmem:[#allocation8 + $0x2d8] sm:$0xff]
    %v316 = vld [vmem:[#allocation8 + $0x2e0] sm:$0xff]
    %v317 = vld [vmem:[#allocation8 + $0x2e8] sm:$0xff]
    %v318 = vld [vmem:[#allocation8 + $0x2f0] sm:$0xff]
    %v319 = vld [vmem:[#allocation8 + $0x2f8] sm:$0xff]
    %v320 = vld [vmem:[#allocation8 + $0x300] sm:$0xff]
    %v321 = vld [vmem:[#allocation8 + $0x308] sm:$0xff]
    %v322 = vld [vmem:[#allocation8 + $0x310] sm:$0xff]
    %v323 = vld [vmem:[#allocation8 + $0x318] sm:$0xff]
    %v324 = vld [vmem:[#allocation8 + $0x320] sm:$0xff]
    %v325 = vld [vmem:[#allocation8 + $0x328] sm:$0xff]
    %v326 = vld [vmem:[#allocation8 + $0x330] sm:$0xff]
    %v327 = vld [vmem:[#allocation8 + $0x338] sm:$0xff]
    %v328 = vld [vmem:[#allocation8 + $0x340] sm:$0xff]
    %v329 = vld [vmem:[#allocation8 + $0x348] sm:$0xff]
    %v330 = vld [vmem:[#allocation8 + $0x350] sm:$0xff]
    %v331 = vld [vmem:[#allocation8 + $0x358] sm:$0xff]
    %v332 = vld [vmem:[#allocation8 + $0x360] sm:$0xff]
    %v333 = vld [vmem:[#allocation8 + $0x368] sm:$0xff]
    %v334 = vld [vmem:[#allocation8 + $0x370] sm:$0xff]
    %v335 = vld [vmem:[#allocation8 + $0x378] sm:$0xff]
    %v336 = vld [vmem:[#allocation8 + $0x380] sm:$0xff]
    %v337 = vld [vmem:[#allocation8 + $0x388] sm:$0xff]
    %v338 = vld [vmem:[#allocation8 + $0x390] sm:$0xff]
    %v339 = vld [vmem:[#allocation8 + $0x398] sm:$0xff]
    %v340 = vld [vmem:[#allocation8 + $0x3a0] sm:$0xff]
    %v341 = vld [vmem:[#allocation8 + $0x3a8] sm:$0xff]
    %v342 = vld [vmem:[#allocation8 + $0x3b0] sm:$0xff]
    %v343 = vld [vmem:[#allocation8 + $0x3b8] sm:$0xff]
    %v344 = vld [vmem:[#allocation8 + $0x3c0] sm:$0xff]
    %v345 = vld [vmem:[#allocation8 + $0x3c8] sm:$0xff]
    %v346 = vld [vmem:[#allocation8 + $0x3d0] sm:$0xff]
    %v347 = vld [vmem:[#allocation8 + $0x3d8] sm:$0xff]
    %v348 = vld [vmem:[#allocation8 + $0x3e0] sm:$0xff]
    %v349 = vld [vmem:[#allocation8 + $0x3e8] sm:$0xff]
    %v350 = vld [vmem:[#allocation8 + $0x3f0] sm:$0xff]
    %v351 = vld [vmem:[#allocation8 + $0x3f8] sm:$0xff]
    %v352 = vld [vmem:[%s4] sm:$0xf]
    %v354 = vperm.slane %v352, 0
    %v355 = vperm.slane %v352, 1
    %v356 = vperm.slane %v352, 2
    %v357 = vperm.slane %v352, 3
    %v490 = vunpack.c.l.b16 %v224
    %v491 = vunpack.c.h.b16 %v224
    %v492 = vunpack.c.l.b16 %v225
    %v493 = vunpack.c.h.b16 %v225
    %v494 = vunpack.c.l.b16 %v226
    %v495 = vunpack.c.h.b16 %v226
    %v496 = vunpack.c.l.b16 %v227
    %v497 = vunpack.c.h.b16 %v227
    %v498 = vunpack.c.l.b16 %v228
    %v499 = vunpack.c.h.b16 %v228
    %v500 = vunpack.c.l.b16 %v229
    %v501 = vunpack.c.h.b16 %v229
    %v502 = vunpack.c.l.b16 %v230
    %v503 = vunpack.c.h.b16 %v230
    %v504 = vunpack.c.l.b16 %v231
    %v505 = vunpack.c.h.b16 %v231
    %v506 = vunpack.c.l.b16 %v232
    %v507 = vunpack.c.h.b16 %v232
    %v508 = vunpack.c.l.b16 %v233
    %v509 = vunpack.c.h.b16 %v233
    %v510 = vunpack.c.l.b16 %v234
    %v511 = vunpack.c.h.b16 %v234
    %v512 = vunpack.c.l.b16 %v235
    %v513 = vunpack.c.h.b16 %v235
    %v514 = vunpack.c.l.b16 %v236
    %v515 = vunpack.c.h.b16 %v236
    %v516 = vunpack.c.l.b16 %v237
    %v517 = vunpack.c.h.b16 %v237
    %v518 = vunpack.c.l.b16 %v238
    %v519 = vunpack.c.h.b16 %v238
    %v520 = vunpack.c.l.b16 %v239
    %v521 = vunpack.c.h.b16 %v239
    %v522 = vunpack.c.l.b16 %v240
    %v523 = vunpack.c.h.b16 %v240
    %v524 = vunpack.c.l.b16 %v241
    %v525 = vunpack.c.h.b16 %v241
    %v526 = vunpack.c.l.b16 %v242
    %v527 = vunpack.c.h.b16 %v242
    %v528 = vunpack.c.l.b16 %v243
    %v529 = vunpack.c.h.b16 %v243
    %v530 = vunpack.c.l.b16 %v244
    %v531 = vunpack.c.h.b16 %v244
    %v532 = vunpack.c.l.b16 %v245
    %v533 = vunpack.c.h.b16 %v245
    %v534 = vunpack.c.l.b16 %v246
    %v535 = vunpack.c.h.b16 %v246
    %v536 = vunpack.c.l.b16 %v247
    %v537 = vunpack.c.h.b16 %v247
    %v538 = vunpack.c.l.b16 %v248
    %v539 = vunpack.c.h.b16 %v248
    %v540 = vunpack.c.l.b16 %v249
    %v541 = vunpack.c.h.b16 %v249
    %v542 = vunpack.c.l.b16 %v250
    %v543 = vunpack.c.h.b16 %v250
    %v544 = vunpack.c.l.b16 %v251
    %v545 = vunpack.c.h.b16 %v251
    %v546 = vunpack.c.l.b16 %v252
    %v547 = vunpack.c.h.b16 %v252
    %v548 = vunpack.c.l.b16 %v253
    %v549 = vunpack.c.h.b16 %v253
    %v550 = vunpack.c.l.b16 %v254
    %v551 = vunpack.c.h.b16 %v254
    %v552 = vunpack.c.l.b16 %v255
    %v553 = vunpack.c.h.b16 %v255
    %v554 = vunpack.c.l.b16 %v256
    %v555 = vunpack.c.h.b16 %v256
    %v556 = vunpack.c.l.b16 %v257
    %v557 = vunpack.c.h.b16 %v257
    %v558 = vunpack.c.l.b16 %v258
    %v559 = vunpack.c.h.b16 %v258
    %v560 = vunpack.c.l.b16 %v259
    %v561 = vunpack.c.h.b16 %v259
    %v562 = vunpack.c.l.b16 %v260
    %v563 = vunpack.c.h.b16 %v260
    %v564 = vunpack.c.l.b16 %v261
    %v565 = vunpack.c.h.b16 %v261
    %v566 = vunpack.c.l.b16 %v262
    %v567 = vunpack.c.h.b16 %v262
    %v568 = vunpack.c.l.b16 %v263
    %v569 = vunpack.c.h.b16 %v263
    %v570 = vunpack.c.l.b16 %v264
    %v571 = vunpack.c.h.b16 %v264
    %v572 = vunpack.c.l.b16 %v265
    %v573 = vunpack.c.h.b16 %v265
    %v574 = vunpack.c.l.b16 %v266
    %v575 = vunpack.c.h.b16 %v266
    %v576 = vunpack.c.l.b16 %v267
    %v577 = vunpack.c.h.b16 %v267
    %v578 = vunpack.c.l.b16 %v268
    %v579 = vunpack.c.h.b16 %v268
    %v580 = vunpack.c.l.b16 %v269
    %v581 = vunpack.c.h.b16 %v269
    %v582 = vunpack.c.l.b16 %v270
    %v583 = vunpack.c.h.b16 %v270
    %v584 = vunpack.c.l.b16 %v271
    %v585 = vunpack.c.h.b16 %v271
    %v586 = vunpack.c.l.b16 %v272
    %v587 = vunpack.c.h.b16 %v272
    %v588 = vunpack.c.l.b16 %v273
    %v589 = vunpack.c.h.b16 %v273
    %v590 = vunpack.c.l.b16 %v274
    %v591 = vunpack.c.h.b16 %v274
    %v592 = vunpack.c.l.b16 %v275
    %v593 = vunpack.c.h.b16 %v275
    %v594 = vunpack.c.l.b16 %v276
    %v595 = vunpack.c.h.b16 %v276
    %v596 = vunpack.c.l.b16 %v277
    %v597 = vunpack.c.h.b16 %v277
    %v598 = vunpack.c.l.b16 %v278
    %v599 = vunpack.c.h.b16 %v278
    %v600 = vunpack.c.l.b16 %v279
    %v601 = vunpack.c.h.b16 %v279
    %v602 = vunpack.c.l.b16 %v280
    %v603 = vunpack.c.h.b16 %v280
    %v604 = vunpack.c.l.b16 %v281
    %v605 = vunpack.c.h.b16 %v281
    %v606 = vunpack.c.l.b16 %v282
    %v607 = vunpack.c.h.b16 %v282
    %v608 = vunpack.c.l.b16 %v283
    %v609 = vunpack.c.h.b16 %v283
    %v610 = vunpack.c.l.b16 %v284
    %v611 = vunpack.c.h.b16 %v284
    %v612 = vunpack.c.l.b16 %v285
    %v613 = vunpack.c.h.b16 %v285
    %v614 = vunpack.c.l.b16 %v286
    %v615 = vunpack.c.h.b16 %v286
    %v616 = vunpack.c.l.b16 %v287
    %v617 = vunpack.c.h.b16 %v287
    %v618 = vunpack.c.l.b16 %v288
    %v619 = vunpack.c.h.b16 %v288
    %v620 = vunpack.c.l.b16 %v289
    %v621 = vunpack.c.h.b16 %v289
    %v622 = vunpack.c.l.b16 %v290
    %v623 = vunpack.c.h.b16 %v290
    %v624 = vunpack.c.l.b16 %v291
    %v625 = vunpack.c.h.b16 %v291
    %v626 = vunpack.c.l.b16 %v292
    %v627 = vunpack.c.h.b16 %v292
    %v628 = vunpack.c.l.b16 %v293
    %v629 = vunpack.c.h.b16 %v293
    %v630 = vunpack.c.l.b16 %v294
    %v631 = vunpack.c.h.b16 %v294
    %v632 = vunpack.c.l.b16 %v295
    %v633 = vunpack.c.h.b16 %v295
    %v634 = vunpack.c.l.b16 %v296
    %v635 = vunpack.c.h.b16 %v296
    %v636 = vunpack.c.l.b16 %v297
    %v637 = vunpack.c.h.b16 %v297
    %v638 = vunpack.c.l.b16 %v298
    %v639 = vunpack.c.h.b16 %v298
    %v640 = vunpack.c.l.b16 %v299
    %v641 = vunpack.c.h.b16 %v299
    %v642 = vunpack.c.l.b16 %v300
    %v643 = vunpack.c.h.b16 %v300
    %v644 = vunpack.c.l.b16 %v301
    %v645 = vunpack.c.h.b16 %v301
    %v646 = vunpack.c.l.b16 %v302
    %v647 = vunpack.c.h.b16 %v302
    %v648 = vunpack.c.l.b16 %v303
    %v649 = vunpack.c.h.b16 %v303
    %v650 = vunpack.c.l.b16 %v304
    %v651 = vunpack.c.h.b16 %v304
    %v652 = vunpack.c.l.b16 %v305
    %v653 = vunpack.c.h.b16 %v305
    %v654 = vunpack.c.l.b16 %v306
    %v655 = vunpack.c.h.b16 %v306
    %v656 = vunpack.c.l.b16 %v307
    %v657 = vunpack.c.h.b16 %v307
    %v658 = vunpack.c.l.b16 %v308
    %v659 = vunpack.c.h.b16 %v308
    %v660 = vunpack.c.l.b16 %v309
    %v661 = vunpack.c.h.b16 %v309
    %v662 = vunpack.c.l.b16 %v310
    %v663 = vunpack.c.h.b16 %v310
    %v664 = vunpack.c.l.b16 %v311
    %v665 = vunpack.c.h.b16 %v311
    %v666 = vunpack.c.l.b16 %v312
    %v667 = vunpack.c.h.b16 %v312
    %v668 = vunpack.c.l.b16 %v313
    %v669 = vunpack.c.h.b16 %v313
    %v670 = vunpack.c.l.b16 %v314
    %v671 = vunpack.c.h.b16 %v314
    %v672 = vunpack.c.l.b16 %v315
    %v673 = vunpack.c.h.b16 %v315
    %v674 = vunpack.c.l.b16 %v316
    %v675 = vunpack.c.h.b16 %v316
    %v676 = vunpack.c.l.b16 %v317
    %v677 = vunpack.c.h.b16 %v317
    %v678 = vunpack.c.l.b16 %v318
    %v679 = vunpack.c.h.b16 %v318
    %v680 = vunpack.c.l.b16 %v319
    %v681 = vunpack.c.h.b16 %v319
    %v682 = vunpack.c.l.b16 %v320
    %v683 = vunpack.c.h.b16 %v320
    %v684 = vunpack.c.l.b16 %v321
    %v685 = vunpack.c.h.b16 %v321
    %v686 = vunpack.c.l.b16 %v322
    %v687 = vunpack.c.h.b16 %v322
    %v688 = vunpack.c.l.b16 %v323
    %v689 = vunpack.c.h.b16 %v323
    %v690 = vunpack.c.l.b16 %v324
    %v691 = vunpack.c.h.b16 %v324
    %v692 = vunpack.c.l.b16 %v325
    %v693 = vunpack.c.h.b16 %v325
    %v694 = vunpack.c.l.b16 %v326
    %v695 = vunpack.c.h.b16 %v326
    %v696 = vunpack.c.l.b16 %v327
    %v697 = vunpack.c.h.b16 %v327
    %v698 = vunpack.c.l.b16 %v328
    %v699 = vunpack.c.h.b16 %v328
    %v700 = vunpack.c.l.b16 %v329
    %v701 = vunpack.c.h.b16 %v329
    %v702 = vunpack.c.l.b16 %v330
    %v703 = vunpack.c.h.b16 %v330
    %v704 = vunpack.c.l.b16 %v331
    %v705 = vunpack.c.h.b16 %v331
    %v706 = vunpack.c.l.b16 %v332
    %v707 = vunpack.c.h.b16 %v332
    %v708 = vunpack.c.l.b16 %v333
    %v709 = vunpack.c.h.b16 %v333
    %v710 = vunpack.c.l.b16 %v334
    %v711 = vunpack.c.h.b16 %v334
    %v712 = vunpack.c.l.b16 %v335
    %v713 = vunpack.c.h.b16 %v335
    %v714 = vunpack.c.l.b16 %v336
    %v715 = vunpack.c.h.b16 %v336
    %v716 = vunpack.c.l.b16 %v337
    %v717 = vunpack.c.h.b16 %v337
    %v718 = vunpack.c.l.b16 %v338
    %v719 = vunpack.c.h.b16 %v338
    %v720 = vunpack.c.l.b16 %v339
    %v721 = vunpack.c.h.b16 %v339
    %v722 = vunpack.c.l.b16 %v340
    %v723 = vunpack.c.h.b16 %v340
    %v724 = vunpack.c.l.b16 %v341
    %v725 = vunpack.c.h.b16 %v341
    %v726 = vunpack.c.l.b16 %v342
    %v727 = vunpack.c.h.b16 %v342
    %v728 = vunpack.c.l.b16 %v343
    %v729 = vunpack.c.h.b16 %v343
    %v730 = vunpack.c.l.b16 %v344
    %v731 = vunpack.c.h.b16 %v344
    %v732 = vunpack.c.l.b16 %v345
    %v733 = vunpack.c.h.b16 %v345
    %v734 = vunpack.c.l.b16 %v346
    %v735 = vunpack.c.h.b16 %v346
    %v736 = vunpack.c.l.b16 %v347
    %v737 = vunpack.c.h.b16 %v347
    %v738 = vunpack.c.l.b16 %v348
    %v739 = vunpack.c.h.b16 %v348
    %v740 = vunpack.c.l.b16 %v349
    %v741 = vunpack.c.h.b16 %v349
    %v742 = vunpack.c.l.b16 %v350
    %v743 = vunpack.c.h.b16 %v350
    %v744 = vunpack.c.l.b16 %v351
    %v745 = vunpack.c.h.b16 %v351
    %v746 = vpack.c.b16 %v494, %v490
    %v747 = vpack.c.b16 %v495, %v491
    %v748 = vpack.c.b16 %v496, %v492
    %v749 = vpack.c.b16 %v497, %v493
    %v750 = vpack.c.b16 %v502, %v498
    %v751 = vpack.c.b16 %v503, %v499
    %v752 = vpack.c.b16 %v504, %v500
    %v753 = vpack.c.b16 %v505, %v501
    %v754 = vpack.c.b16 %v510, %v506
    %v755 = vpack.c.b16 %v511, %v507
    %v756 = vpack.c.b16 %v512, %v508
    %v757 = vpack.c.b16 %v513, %v509
    %v758 = vpack.c.b16 %v518, %v514
    %v759 = vpack.c.b16 %v519, %v515
    %v760 = vpack.c.b16 %v520, %v516
    %v761 = vpack.c.b16 %v521, %v517
    %v762 = vpack.c.b16 %v526, %v522
    %v763 = vpack.c.b16 %v527, %v523
    %v764 = vpack.c.b16 %v528, %v524
    %v765 = vpack.c.b16 %v529, %v525
    %v766 = vpack.c.b16 %v534, %v530
    %v767 = vpack.c.b16 %v535, %v531
    %v768 = vpack.c.b16 %v536, %v532
    %v769 = vpack.c.b16 %v537, %v533
    %v770 = vpack.c.b16 %v542, %v538
    %v771 = vpack.c.b16 %v543, %v539
    %v772 = vpack.c.b16 %v544, %v540
    %v773 = vpack.c.b16 %v545, %v541
    %v774 = vpack.c.b16 %v550, %v546
    %v775 = vpack.c.b16 %v551, %v547
    %v776 = vpack.c.b16 %v552, %v548
    %v777 = vpack.c.b16 %v553, %v549
    %v778 = vpack.c.b16 %v558, %v554
    %v779 = vpack.c.b16 %v559, %v555
    %v780 = vpack.c.b16 %v560, %v556
    %v781 = vpack.c.b16 %v561, %v557
    %v782 = vpack.c.b16 %v566, %v562
    %v783 = vpack.c.b16 %v567, %v563
    %v784 = vpack.c.b16 %v568, %v564
    %v785 = vpack.c.b16 %v569, %v565
    %v786 = vpack.c.b16 %v574, %v570
    %v787 = vpack.c.b16 %v575, %v571
    %v788 = vpack.c.b16 %v576, %v572
    %v789 = vpack.c.b16 %v577, %v573
    %v790 = vpack.c.b16 %v582, %v578
    %v791 = vpack.c.b16 %v583, %v579
    %v792 = vpack.c.b16 %v584, %v580
    %v793 = vpack.c.b16 %v585, %v581
    %v794 = vpack.c.b16 %v590, %v586
    %v795 = vpack.c.b16 %v591, %v587
    %v796 = vpack.c.b16 %v592, %v588
    %v797 = vpack.c.b16 %v593, %v589
    %v798 = vpack.c.b16 %v598, %v594
    %v799 = vpack.c.b16 %v599, %v595
    %v800 = vpack.c.b16 %v600, %v596
    %v801 = vpack.c.b16 %v601, %v597
    %v802 = vpack.c.b16 %v606, %v602
    %v803 = vpack.c.b16 %v607, %v603
    %v804 = vpack.c.b16 %v608, %v604
    %v805 = vpack.c.b16 %v609, %v605
    %v806 = vpack.c.b16 %v614, %v610
    %v807 = vpack.c.b16 %v615, %v611
    %v808 = vpack.c.b16 %v616, %v612
    %v809 = vpack.c.b16 %v617, %v613
    %v810 = vpack.c.b16 %v622, %v618
    %v811 = vpack.c.b16 %v623, %v619
    %v812 = vpack.c.b16 %v624, %v620
    %v813 = vpack.c.b16 %v625, %v621
    %v814 = vpack.c.b16 %v630, %v626
    %v815 = vpack.c.b16 %v631, %v627
    %v816 = vpack.c.b16 %v632, %v628
    %v817 = vpack.c.b16 %v633, %v629
    %v818 = vpack.c.b16 %v638, %v634
    %v819 = vpack.c.b16 %v639, %v635
    %v820 = vpack.c.b16 %v640, %v636
    %v821 = vpack.c.b16 %v641, %v637
    %v822 = vpack.c.b16 %v646, %v642
    %v823 = vpack.c.b16 %v647, %v643
    %v824 = vpack.c.b16 %v648, %v644
    %v825 = vpack.c.b16 %v649, %v645
    %v826 = vpack.c.b16 %v654, %v650
    %v827 = vpack.c.b16 %v655, %v651
    %v828 = vpack.c.b16 %v656, %v652
    %v829 = vpack.c.b16 %v657, %v653
    %v830 = vpack.c.b16 %v662, %v658
    %v831 = vpack.c.b16 %v663, %v659
    %v832 = vpack.c.b16 %v664, %v660
    %v833 = vpack.c.b16 %v665, %v661
    %v834 = vpack.c.b16 %v670, %v666
    %v835 = vpack.c.b16 %v671, %v667
    %v836 = vpack.c.b16 %v672, %v668
    %v837 = vpack.c.b16 %v673, %v669
    %v838 = vpack.c.b16 %v678, %v674
    %v839 = vpack.c.b16 %v679, %v675
    %v840 = vpack.c.b16 %v680, %v676
    %v841 = vpack.c.b16 %v681, %v677
    %v842 = vpack.c.b16 %v686, %v682
    %v843 = vpack.c.b16 %v687, %v683
    %v844 = vpack.c.b16 %v688, %v684
    %v845 = vpack.c.b16 %v689, %v685
    %v846 = vpack.c.b16 %v694, %v690
    %v847 = vpack.c.b16 %v695, %v691
    %v848 = vpack.c.b16 %v696, %v692
    %v849 = vpack.c.b16 %v697, %v693
    %v850 = vpack.c.b16 %v702, %v698
    %v851 = vpack.c.b16 %v703, %v699
    %v852 = vpack.c.b16 %v704, %v700
    %v853 = vpack.c.b16 %v705, %v701
    %v854 = vpack.c.b16 %v710, %v706
    %v855 = vpack.c.b16 %v711, %v707
    %v856 = vpack.c.b16 %v712, %v708
    %v857 = vpack.c.b16 %v713, %v709
    %v858 = vpack.c.b16 %v718, %v714
    %v859 = vpack.c.b16 %v719, %v715
    %v860 = vpack.c.b16 %v720, %v716
    %v861 = vpack.c.b16 %v721, %v717
    %v862 = vpack.c.b16 %v726, %v722
    %v863 = vpack.c.b16 %v727, %v723
    %v864 = vpack.c.b16 %v728, %v724
    %v865 = vpack.c.b16 %v729, %v725
    %v866 = vpack.c.b16 %v734, %v730
    %v867 = vpack.c.b16 %v735, %v731
    %v868 = vpack.c.b16 %v736, %v732
    %v869 = vpack.c.b16 %v737, %v733
    %v870 = vpack.c.b16 %v742, %v738
    %v871 = vpack.c.b16 %v743, %v739
    %v872 = vpack.c.b16 %v744, %v740
    %v873 = vpack.c.b16 %v745, %v741
    %1002 = vmatpush.bf16.msra.mxu0 %v774
    %1003 = vmatpush.bf16.msra.mxu0 %v770
    %1004 = vmatpush.bf16.msra.mxu0 %v766
    %1005 = vmatpush.bf16.msra.mxu0 %v762
    %1006 = vmatpush.bf16.msra.mxu0 %v758
    %1007 = vmatpush.bf16.msra.mxu0 %v754
    %1008 = vmatpush.bf16.msra.mxu0 %v750
    %1009 = vmatpush.bf16.msra.mxu0 %v746
    %1010 = vmatmul.bf16.gmra.mxu0 %v220
    %v1011 = vpop.f32.mrf.mxu0
    %v1012 = vadd.f32 %v354, %v1011
    %v1013 = vpop.f32.mrf.mxu0
    %1014 = vdwg.mxu0
    %1015 = vmatpush.bf16.msra.mxu0 %v806
    %1016 = vmatpush.bf16.msra.mxu0 %v802
    %1017 = vmatpush.bf16.msra.mxu0 %v798
    %1018 = vmatpush.bf16.msra.mxu0 %v794
    %1019 = vmatpush.bf16.msra.mxu0 %v790
    %1020 = vmatpush.bf16.msra.mxu0 %v786
    %1021 = vmatpush.bf16.msra.mxu0 %v782
    %1022 = vmatpush.bf16.msra.mxu0 %v778
    %1023 = vmatmul.bf16.gmra.mxu0 %v221
    %v1024 = vpop.f32.mrf.mxu0
    %v1025 = vadd.f32 %v1012, %v1024
    %v1026 = vpop.f32.mrf.mxu0
    %1027 = vdwg.mxu0
    %1028 = vmatpush.bf16.msra.mxu0 %v838
    %1029 = vmatpush.bf16.msra.mxu0 %v834
    %1030 = vmatpush.bf16.msra.mxu0 %v830
    %1031 = vmatpush.bf16.msra.mxu0 %v826
    %1032 = vmatpush.bf16.msra.mxu0 %v822
    %1033 = vmatpush.bf16.msra.mxu0 %v818
    %1034 = vmatpush.bf16.msra.mxu0 %v814
    %1035 = vmatpush.bf16.msra.mxu0 %v810
    %1036 = vmatmul.bf16.gmra.mxu0 %v222
    %v1037 = vpop.f32.mrf.mxu0
    %v1038 = vadd.f32 %v1025, %v1037
    %v1039 = vpop.f32.mrf.mxu0
    %1040 = vdwg.mxu0
    %1041 = vmatpush.bf16.msra.mxu0 %v870
    %1042 = vmatpush.bf16.msra.mxu0 %v866
    %1043 = vmatpush.bf16.msra.mxu0 %v862
    %1044 = vmatpush.bf16.msra.mxu0 %v858
    %1045 = vmatpush.bf16.msra.mxu0 %v854
    %1046 = vmatpush.bf16.msra.mxu0 %v850
    %1047 = vmatpush.bf16.msra.mxu0 %v846
    %1048 = vmatpush.bf16.msra.mxu0 %v842
    %1049 = vmatmul.bf16.gmra.mxu0 %v223
    %v1050 = vpop.f32.mrf.mxu0
    %v1051 = vadd.f32 %v1038, %v1050
    %v1052 = vpop.f32.mrf.mxu0
    %1053 = vdwg.mxu0
    %1054 = vmatpush.bf16.msra.mxu0 %v775
    %1055 = vmatpush.bf16.msra.mxu0 %v771
    %1056 = vmatpush.bf16.msra.mxu0 %v767
    %1057 = vmatpush.bf16.msra.mxu0 %v763
    %1058 = vmatpush.bf16.msra.mxu0 %v759
    %1059 = vmatpush.bf16.msra.mxu0 %v755
    %1060 = vmatpush.bf16.msra.mxu0 %v751
    %1061 = vmatpush.bf16.msra.mxu0 %v747
    %1062 = vmatmul.bf16.gmra.mxu0 %v220
    %v1063 = vpop.f32.mrf.mxu0
    %v1064 = vadd.f32 %v355, %v1063
    %v1065 = vpop.f32.mrf.mxu0
    %1066 = vdwg.mxu0
    %1067 = vmatpush.bf16.msra.mxu0 %v807
    %1068 = vmatpush.bf16.msra.mxu0 %v803
    %1069 = vmatpush.bf16.msra.mxu0 %v799
    %1070 = vmatpush.bf16.msra.mxu0 %v795
    %1071 = vmatpush.bf16.msra.mxu0 %v791
    %1072 = vmatpush.bf16.msra.mxu0 %v787
    %1073 = vmatpush.bf16.msra.mxu0 %v783
    %1074 = vmatpush.bf16.msra.mxu0 %v779
    %1075 = vmatmul.bf16.gmra.mxu0 %v221
    %v1076 = vpop.f32.mrf.mxu0
    %v1077 = vadd.f32 %v1064, %v1076
    %v1078 = vpop.f32.mrf.mxu0
    %1079 = vdwg.mxu0
    %1080 = vmatpush.bf16.msra.mxu0 %v839
    %1081 = vmatpush.bf16.msra.mxu0 %v835
    %1082 = vmatpush.bf16.msra.mxu0 %v831
    %1083 = vmatpush.bf16.msra.mxu0 %v827
    %1084 = vmatpush.bf16.msra.mxu0 %v823
    %1085 = vmatpush.bf16.msra.mxu0 %v819
    %1086 = vmatpush.bf16.msra.mxu0 %v815
    %1087 = vmatpush.bf16.msra.mxu0 %v811
    %1088 = vmatmul.bf16.gmra.mxu0 %v222
    %v1089 = vpop.f32.mrf.mxu0
    %v1090 = vadd.f32 %v1077, %v1089
    %v1091 = vpop.f32.mrf.mxu0
    %1092 = vdwg.mxu0
    %1093 = vmatpush.bf16.msra.mxu0 %v871
    %1094 = vmatpush.bf16.msra.mxu0 %v867
    %1095 = vmatpush.bf16.msra.mxu0 %v863
    %1096 = vmatpush.bf16.msra.mxu0 %v859
    %1097 = vmatpush.bf16.msra.mxu0 %v855
    %1098 = vmatpush.bf16.msra.mxu0 %v851
    %1099 = vmatpush.bf16.msra.mxu0 %v847
    %1100 = vmatpush.bf16.msra.mxu0 %v843
    %1101 = vmatmul.bf16.gmra.mxu0 %v223
    %v1102 = vpop.f32.mrf.mxu0
    %v1103 = vadd.f32 %v1090, %v1102
    %v1104 = vpop.f32.mrf.mxu0
    %1105 = vdwg.mxu0
    %1106 = vmatpush.bf16.msra.mxu0 %v776
    %1107 = vmatpush.bf16.msra.mxu0 %v772
    %1108 = vmatpush.bf16.msra.mxu0 %v768
    %1109 = vmatpush.bf16.msra.mxu0 %v764
    %1110 = vmatpush.bf16.msra.mxu0 %v760
    %1111 = vmatpush.bf16.msra.mxu0 %v756
    %1112 = vmatpush.bf16.msra.mxu0 %v752
    %1113 = vmatpush.bf16.msra.mxu0 %v748
    %1114 = vmatmul.bf16.gmra.mxu0 %v220
    %v1115 = vpop.f32.mrf.mxu0
    %v1116 = vadd.f32 %v356, %v1115
    %v1117 = vpop.f32.mrf.mxu0
    %1118 = vdwg.mxu0
    %1119 = vmatpush.bf16.msra.mxu0 %v808
    %1120 = vmatpush.bf16.msra.mxu0 %v804
    %1121 = vmatpush.bf16.msra.mxu0 %v800
    %1122 = vmatpush.bf16.msra.mxu0 %v796
    %1123 = vmatpush.bf16.msra.mxu0 %v792
    %1124 = vmatpush.bf16.msra.mxu0 %v788
    %1125 = vmatpush.bf16.msra.mxu0 %v784
    %1126 = vmatpush.bf16.msra.mxu0 %v780
    %1127 = vmatmul.bf16.gmra.mxu0 %v221
    %v1128 = vpop.f32.mrf.mxu0
    %v1129 = vadd.f32 %v1116, %v1128
    %v1130 = vpop.f32.mrf.mxu0
    %1131 = vdwg.mxu0
    %1132 = vmatpush.bf16.msra.mxu0 %v840
    %1133 = vmatpush.bf16.msra.mxu0 %v836
    %1134 = vmatpush.bf16.msra.mxu0 %v832
    %1135 = vmatpush.bf16.msra.mxu0 %v828
    %1136 = vmatpush.bf16.msra.mxu0 %v824
    %1137 = vmatpush.bf16.msra.mxu0 %v820
    %1138 = vmatpush.bf16.msra.mxu0 %v816
    %1139 = vmatpush.bf16.msra.mxu0 %v812
    %1140 = vmatmul.bf16.gmra.mxu0 %v222
    %v1141 = vpop.f32.mrf.mxu0
    %v1142 = vadd.f32 %v1129, %v1141
    %v1143 = vpop.f32.mrf.mxu0
    %1144 = vdwg.mxu0
    %1145 = vmatpush.bf16.msra.mxu0 %v872
    %1146 = vmatpush.bf16.msra.mxu0 %v868
    %1147 = vmatpush.bf16.msra.mxu0 %v864
    %1148 = vmatpush.bf16.msra.mxu0 %v860
    %1149 = vmatpush.bf16.msra.mxu0 %v856
    %1150 = vmatpush.bf16.msra.mxu0 %v852
    %1151 = vmatpush.bf16.msra.mxu0 %v848
    %1152 = vmatpush.bf16.msra.mxu0 %v844
    %1153 = vmatmul.bf16.gmra.mxu0 %v223
    %v1154 = vpop.f32.mrf.mxu0
    %v1155 = vadd.f32 %v1142, %v1154
    %v1156 = vpop.f32.mrf.mxu0
    %1157 = vdwg.mxu0
    %1158 = vmatpush.bf16.msra.mxu0 %v777
    %1159 = vmatpush.bf16.msra.mxu0 %v773
    %1160 = vmatpush.bf16.msra.mxu0 %v769
    %1161 = vmatpush.bf16.msra.mxu0 %v765
    %1162 = vmatpush.bf16.msra.mxu0 %v761
    %1163 = vmatpush.bf16.msra.mxu0 %v757
    %1164 = vmatpush.bf16.msra.mxu0 %v753
    %1165 = vmatpush.bf16.msra.mxu0 %v749
    %1166 = vmatmul.bf16.gmra.mxu0 %v220
    %v1167 = vpop.f32.mrf.mxu0
    %v1168 = vadd.f32 %v357, %v1167
    %v1169 = vpop.f32.mrf.mxu0
    %1170 = vdwg.mxu0
    %1171 = vmatpush.bf16.msra.mxu0 %v809
    %1172 = vmatpush.bf16.msra.mxu0 %v805
    %1173 = vmatpush.bf16.msra.mxu0 %v801
    %1174 = vmatpush.bf16.msra.mxu0 %v797
    %1175 = vmatpush.bf16.msra.mxu0 %v793
    %1176 = vmatpush.bf16.msra.mxu0 %v789
    %1177 = vmatpush.bf16.msra.mxu0 %v785
    %1178 = vmatpush.bf16.msra.mxu0 %v781
    %1179 = vmatmul.bf16.gmra.mxu0 %v221
    %v1180 = vpop.f32.mrf.mxu0
    %v1181 = vadd.f32 %v1168, %v1180
    %v1182 = vpop.f32.mrf.mxu0
    %1183 = vdwg.mxu0
    %1184 = vmatpush.bf16.msra.mxu0 %v841
    %1185 = vmatpush.bf16.msra.mxu0 %v837
    %1186 = vmatpush.bf16.msra.mxu0 %v833
    %1187 = vmatpush.bf16.msra.mxu0 %v829
    %1188 = vmatpush.bf16.msra.mxu0 %v825
    %1189 = vmatpush.bf16.msra.mxu0 %v821
    %1190 = vmatpush.bf16.msra.mxu0 %v817
    %1191 = vmatpush.bf16.msra.mxu0 %v813
    %1192 = vmatmul.bf16.gmra.mxu0 %v222
    %v1193 = vpop.f32.mrf.mxu0
    %v1194 = vadd.f32 %v1181, %v1193
    %v1195 = vpop.f32.mrf.mxu0
    %1196 = vdwg.mxu0
    %1197 = vmatpush.bf16.msra.mxu0 %v873
    %1198 = vmatpush.bf16.msra.mxu0 %v869
    %1199 = vmatpush.bf16.msra.mxu0 %v865
    %1200 = vmatpush.bf16.msra.mxu0 %v861
    %1201 = vmatpush.bf16.msra.mxu0 %v857
    %1202 = vmatpush.bf16.msra.mxu0 %v853
    %1203 = vmatpush.bf16.msra.mxu0 %v849
    %1204 = vmatpush.bf16.msra.mxu0 %v845
    %1205 = vmatmul.bf16.gmra.mxu0 %v223
    %v1206 = vpop.f32.mrf.mxu0
    %v1207 = vadd.f32 %v1194, %v1206
    %v1208 = vpop.f32.mrf.mxu0
    %1209 = vdwg.mxu0
    %v1210 = vmax.f32 %v1051, 0.0
    %v1211 = vmax.f32 %v1103, 0.0
    %v1212 = vmax.f32 %v1155, 0.0
    %v1213 = vmax.f32 %v1207, 0.0
    %v1214 = vld [vmem:[#allocation10] sm:$0xf]
    %v1216 = vperm.slane %v1214, 0
    %v1217 = vperm.slane %v1214, 1
    %v1218 = vperm.slane %v1214, 2
    %v1219 = vperm.slane %v1214, 3
    %v1224 = vmul.f32 %v1210, %v1216
    %v1225 = vmul.f32 %v1211, %v1217
    %v1226 = vmul.f32 %v1212, %v1218
    %v1227 = vmul.f32 %v1213, %v1219
    %v1228 = vadd.f32 %v1224, %v1225
    %v1229 = vadd.f32 %v1228, %v1226
    %v1230 = vadd.f32 %v1229, %v1227
    %1231 = vadd.xlane.f32.xlu0 %v1230
    %v1232 = vpop.xlane.xlu0 %1231
    %s1233 = sld [smem:[#allocation2]]
    %v1234 = vstv %s1233
    %v1235 = vadd.f32 %v1232, %v1234
    %vm1236 = vcmask 7168
    %1237 = vst.msk [vmem:[%s7] sm:$0xff] %vm1236, %v1235
    // Predicated region
    $region50: #{tpu_custom_call.1} parent=1 // pred_check
      _
    $region51: #{tpu_custom_call.1} parent=1 // pred_check_branch
      %1239 = sbr.rel (0) target = $region53
    $region52: #{tpu_custom_call.1} parent=1 // pred_region
      _
    $region53: #{tpu_custom_call.1} parent=1 // pred_fallthru
      _
    // Predicated region
    $region54: #{tpu_custom_call.1} parent=1 // pred_check
      _
    $region55: #{tpu_custom_call.1} parent=1 // pred_check_branch
      %1241 = sbr.rel (0) target = $region57
    $region56: #{tpu_custom_call.1} parent=1 // pred_region
      _
    $region57: #{tpu_custom_call.1} parent=1 // pred_fallthru
      _
    %1242 = vsyncpa [#allocation4], 1
    %1243 = vsyncpa [#allocation6], 1
    %1244 = vsyncpa [#allocation9], 1

</llo_original>
